<compile_context>
chip_gen: v7x
topology: tpu7x:2x2x1
jax: 0.10.0
libtpu: 0.0.40
codegen_flags: <defaults>
</compile_context>

<pallas_src>
import functools

import jax
import jax.numpy as jnp
from jax import lax
from jax.experimental import pallas as pl
from jax.experimental.pallas import tpu as pltpu


# Static gate multipliers hard-coded in the PyTorch module:
#   vid_gate = sigmoid(temp_vid) * 2 ; aud_gate = sigmoid(temp_aud) * 0 ; ocr_gate = ... * 0
# NOTE: if those literal *0 multipliers ever change, the corresponding branches must be
# re-enabled here (they are statically skipped below).
_GATE_MULTIPLIERS = (2.0, 0.0, 0.0)
_EPS_SQ = 1e-24  # (torch F.normalize eps=1e-12)^2

# dot_general contracting the last dim of both operands (A @ B^T); this is the
# canonical MXU-friendly form used by the Pallas flash-attention kernels.
_NT_DIMS = (((1,), (1,)), ((), ()))


def _cosine_exp_kernel(*refs, has_mask):
    """One grid step: a (TN, D) tile of K -> (1, TN) tile of exp(clip(cos(q,k)*mask,0,1)).

    Tiles are independent (no cross-tile state), so the grid axis is "parallel".
    """
    if has_mask:
        q_ref, k_ref, m_ref, exp_ref = refs
    else:
        q_ref, k_ref, exp_ref = refs

    k_nat = k_ref[...]                      # (TN, D), native dtype (bf16 halves HBM traffic)
    q_hat = q_ref[...]                      # (8, D), pre-normalized q replicated on sublanes
    d = k_nat.shape[-1]

    # MXU: q_hat @ K^T -> (8, TN); row 0 is the lane-dense score row.
    qk = lax.dot_general(q_hat, k_nat, _NT_DIMS,
                         preferred_element_type=jnp.float32)[0:1, :]     # (1, TN)

    # MXU: column sums of K*K -> ||k_j||^2 per key, also lane-dense.  Square in f32.
    k_f32 = k_nat.astype(jnp.float32)
    ones = jnp.ones((8, d), jnp.float32)
    kk = lax.dot_general(ones, k_f32 * k_f32, _NT_DIMS,
                         preferred_element_type=jnp.float32)[0:1, :]     # (1, TN)

    # cosine(q, k) = (q_hat . k) / max(||k||, 1e-12)   (q is already unit-norm)
    s = qk * lax.rsqrt(jnp.maximum(kk, _EPS_SQ))                         # (1, TN)

    if has_mask:
        s = s * m_ref[...].astype(jnp.float32)                           # multiplicative mask
    s = jnp.clip(s, 0.0, 1.0)

    # s in [0, 1] -> exp(s) in [1, e]: softmax needs no max-subtraction, so the tiles
    # stay independent and normalization happens in the O(N) JAX epilogue.
    exp_ref[...] = jnp.exp(s)


def _branch_exp_row(q_hat8, k, mask_row, *, tile_n=None,
                    tile_bytes=4 * 1024 * 1024):
    """Pallas call for one (q, k) branch.  Returns (1, N) f32 unnormalized exp(score)."""
    n, d = k.shape
    itemsize = jnp.dtype(k.dtype).itemsize

    if tile_n is None:
        tile_n = max(128, ((tile_bytes // (d * itemsize)) // 128) * 128)
    else:
        tile_n = max(128, (int(tile_n) // 128) * 128)

    if n <= tile_n:
        tn, grid_n = n, 1                    # small-N fast path: one step, exact block
    else:
        tn, grid_n = tile_n, pl.cdiv(n, tile_n)

    has_mask = mask_row is not None
    kernel = functools.partial(_cosine_exp_kernel, has_mask=has_mask)

    in_specs = [
        pl.BlockSpec((8, d), lambda i: (0, 0)),      # q_hat: resident across the grid
        pl.BlockSpec((tn, d), lambda i: (i, 0)),     # K: streamed, double-buffered
    ]
    args = [q_hat8, k]
    if has_mask:
        in_specs.append(pl.BlockSpec((1, tn), lambda i: (0, i)))   # lane-dense mask row
        args.append(mask_row)

    exp_row = pl.pallas_call(
        kernel,
        grid=(grid_n,),
        in_specs=in_specs,
        out_specs=pl.BlockSpec((1, tn), lambda i: (0, i)),         # lane-dense output row
        out_shape=jax.ShapeDtypeStruct((1, n), jnp.float32),
        compiler_params=pltpu.CompilerParams(
            dimension_semantics=("parallel",)),      # no cross-tile state -> v7x 2-TC shard
    )(*args)
    return exp_row


def _topk_group(score, top_k, skip_self):
    """TopKGroup.forward for a (1, N) score vector."""
    # TODO(synk): the data-dependent top-k index scatter has no clean Pallas equivalent;
    # done with lax.top_k / indexed update in plain JAX (matches the torch code 1:1).
    n = score.shape[-1]
    kk = min(top_k, n)
    _, top_idx = lax.top_k(score, kk)              # (1, kk)
    self_top = jnp.argmax(score, axis=-1)          # (1,)
    top_idx = jnp.squeeze(top_idx, 0)              # (kk,)
    m = jnp.zeros((n,), score.dtype).at[top_idx].set(1.0)
    if skip_self:
        m = m.at[self_top].set(0.0)
    return score * m[None, :]


@functools.partial(jax.jit, static_argnames=("skip_self", "top_k", "tile_n"))
def _forward(q1, k1, q2, k2, q3, k3, mask, temps, *, skip_self, top_k, tile_n=None):
    n, _ = k1.shape
    mask_row = None if mask is None else jnp.reshape(mask, (1, n))

    branch_defs = [(q1, k1, 0, _GATE_MULTIPLIERS[0]),
                   (q2, k2, 1, _GATE_MULTIPLIERS[1])]
    if q3 is not None:
        branch_defs.append((q3, k3, 2, _GATE_MULTIPLIERS[2]))

    attention = jnp.zeros((1, n), jnp.float32)
    for bq, bk, ti, mult in branch_defs:
        if mult == 0.0:
            continue  # statically dead branch (aud/ocr): no DMA, no compute
        d = bk.shape[-1]
        # Normalize q once (O(D)) in the wrapper, not once per K tile.
        bq = jnp.reshape(bq, (1, d)).astype(jnp.float32)
        q_hat = bq * lax.rsqrt(jnp.maximum(jnp.sum(bq * bq, -1, keepdims=True), _EPS_SQ))
        # Replicate to 8 sublanes (MXU-friendly LHS) in K's native dtype (bf16 stays bf16).
        q_hat8 = jnp.broadcast_to(q_hat.astype(bk.dtype), (8, d))

        exp_row = _branch_exp_row(q_hat8, bk, mask_row, tile_n=tile_n)   # (1, N) f32

        gate = jax.nn.sigmoid(temps[ti]) * mult
        denom = jnp.sum(exp_row, axis=-1, keepdims=True)                 # softmax denom
        attention = attention + exp_row * (gate / denom)                 # O(N) epilogue

    out = _topk_group(attention, top_k, skip_self)
    return attention, out


def nobrain_encoder_block_v4(q1, k1, q2, k2, q3=None, k3=None, mask=None,
                             temps=None, skip_self=True, top_k=25, tile_n=None):
    """Equivalent of NoBrainEncoderBlockV4.forward (batch of 1)."""
    if temps is None:
        temps = jnp.zeros((3,), jnp.float32)  # nn.Parameter(torch.zeros(1)) x 3
    _, out = _forward(q1, k1, q2, k2, q3, k3, mask, temps,
                      skip_self=skip_self, top_k=top_k, tile_n=tile_n)
    return out


if __name__ == "__main__":
    key = jax.random.PRNGKey(0)
    D = 128   # feature dim
    N = 200   # number of keys (not a multiple of 128 -> exercises the partial-tile path)
    ks = jax.random.split(key, 6)
    q1 = jax.random.normal(ks[0], (1, D), jnp.float32)
    k1 = jax.random.normal(ks[1], (N, D), jnp.float32)
    q2 = jax.random.normal(ks[2], (1, D), jnp.float32)
    k2 = jax.random.normal(ks[3], (N, D), jnp.float32)
    q3 = jax.random.normal(ks[4], (1, D), jnp.float32)
    k3 = jax.random.normal(ks[5], (N, D), jnp.float32)
    temps = jnp.zeros((3,), jnp.float32)

    # Force a small tile (grid of 2 over N=200, partial last block) to exercise streaming.
    attention, out = _forward(q1, k1, q2, k2, q3, k3, None, temps,
                              skip_self=True, top_k=25, tile_n=128)
    attention = jax.block_until_ready(attention)
    out = jax.block_until_ready(out)

    # Pure-JAX reference of the pre-TopK attention (only the vid branch is nonzero).
    vid_gate = jax.nn.sigmoid(temps[0]) * 2.0
    qn = q1 / jnp.maximum(jnp.linalg.norm(q1, axis=-1, keepdims=True), 1e-12)
    kn = k1 / jnp.maximum(jnp.linalg.norm(k1, axis=-1, keepdims=True), 1e-12)
    s_ref = jnp.clip(jnp.matmul(qn, kn.T, precision=jax.lax.Precision.HIGHEST), 0.0, 1.0)
    att_ref = jax.nn.softmax(s_ref, axis=-1) * vid_gate

    assert out.shape == (1, N) and out.dtype == jnp.float32
    assert bool(jnp.all(jnp.isfinite(out)))
    assert int(jnp.sum(out != 0.0)) <= 25
    assert bool(jnp.allclose(attention, att_ref, rtol=1e-2, atol=1e-4))

    # Mask path (multiplicative mask of ones must reproduce the unmasked result).
    att_masked, _ = _forward(q1, k1, q2, k2, q3, k3, jnp.ones((1, N), jnp.float32), temps,
                             skip_self=True, top_k=25, tile_n=128)
    att_masked = jax.block_until_ready(att_masked)
    assert bool(jnp.allclose(att_masked, attention, rtol=1e-5, atol=1e-6))

    # Public wrapper with the default (auto, ~4 MiB) tile -> single-block fast path.
    out2 = jax.block_until_ready(
        nobrain_encoder_block_v4(q1, k1, q2, k2, q3, k3, mask=None,
                                 skip_self=True, top_k=25))
    assert out2.shape == (1, N)
    assert bool(jnp.allclose(out2, out, rtol=1e-3, atol=1e-5))

    print("KERNEL_OK")
</pallas_src>

<mosaic_0001>
module attributes {stable_mosaic.version = 11 : i64} {
  func.func @_cosine_exp_kernel(%arg0: i32, %arg1: memref<8x128xf32, #tpu.memory_space<vmem>>, %arg2: memref<128x128xf32, #tpu.memory_space<vmem>>, %arg3: memref<1x128xf32, #tpu.memory_space<vmem>>) attributes {dimension_semantics = [#tpu.dimension_semantics<parallel>], iteration_bounds = array<i64: 2>, scalar_prefetch = 0 : i64, scratch_operands = 0 : i64, tpu.core_type = #tpu.core_type<tc>, window_params = [{pipeline_mode = #tpu.pipeline_mode<synchronous>, transform_indices = @transform_0, window_bounds = array<i64: 8, 128>}, {transform_indices = @transform_1, window_bounds = array<i64: 128, 128>}, {transform_indices = @transform_2, window_bounds = array<i64: 1, 128>}]} {
    %c0 = arith.constant 0 : index
    %c0_0 = arith.constant 0 : index
    %0 = vector.load %arg2[%c0, %c0_0] : memref<128x128xf32, #tpu.memory_space<vmem>>, vector<128x128xf32>
    %c0_1 = arith.constant 0 : index
    %c0_2 = arith.constant 0 : index
    %1 = vector.load %arg1[%c0_1, %c0_2] : memref<8x128xf32, #tpu.memory_space<vmem>>, vector<8x128xf32>
    %cst = arith.constant dense<0.000000e+00> : vector<8x128xf32>
    %2 = tpu.matmul %1, %0, %cst {dimension_numbers = #tpu.dot_dimension_numbers<[1], [1], [0], [0], [0, 0, 1, 0], [], []>} : vector<8x128xf32>, vector<128x128xf32>, vector<8x128xf32> -> vector<8x128xf32>
    %3 = vector.extract_strided_slice %2 {offsets = [0, 0], sizes = [1, 128], strides = [1, 1]} : vector<8x128xf32> to vector<1x128xf32>
    %cst_3 = arith.constant 1.000000e+00 : f32
    %4 = vector.broadcast %cst_3 : f32 to vector<8x128xf32>
    %5 = arith.mulf %0, %0 : vector<128x128xf32>
    %cst_4 = arith.constant dense<0.000000e+00> : vector<8x128xf32>
    %6 = tpu.matmul %4, %5, %cst_4 {dimension_numbers = #tpu.dot_dimension_numbers<[1], [1], [0], [0], [0, 0, 1, 0], [], []>} : vector<8x128xf32>, vector<128x128xf32>, vector<8x128xf32> -> vector<8x128xf32>
    %7 = vector.extract_strided_slice %6 {offsets = [0, 0], sizes = [1, 128], strides = [1, 1]} : vector<8x128xf32> to vector<1x128xf32>
    %cst_5 = arith.constant 1.000000e-24 : f32
    %8 = vector.broadcast %cst_5 : f32 to vector<1x128xf32>
    %9 = arith.maximumf %7, %8 : vector<1x128xf32>
    %10 = math.rsqrt %9 : vector<1x128xf32>
    %11 = arith.mulf %3, %10 : vector<1x128xf32>
    %cst_6 = arith.constant 0.000000e+00 : f32
    %cst_7 = arith.constant 1.000000e+00 : f32
    %12 = vector.broadcast %cst_6 : f32 to vector<1x128xf32>
    %13 = arith.maximumf %12, %11 : vector<1x128xf32>
    %14 = vector.broadcast %cst_7 : f32 to vector<1x128xf32>
    %15 = arith.minimumf %14, %13 : vector<1x128xf32>
    %16 = math.exp %15 : vector<1x128xf32>
    %c0_8 = arith.constant 0 : index
    %c0_9 = arith.constant 0 : index
    %17 = vector.load %arg3[%c0_8, %c0_9] : memref<1x128xf32, #tpu.memory_space<vmem>>, vector<1x128xf32>
    tpu.vector_store %arg3[%c0_8, %c0_9], %16 {strides = array<i32>} : memref<1x128xf32, #tpu.memory_space<vmem>>, vector<1x128xf32>,
    return
  }
  func.func @transform_0(%arg0: i32) -> (i32, i32) {
    %c0_i32 = arith.constant 0 : i32
    %c0_i32_0 = arith.constant 0 : i32
    %c0_i32_1 = arith.constant 0 : i32
    return %c0_i32, %c0_i32_0 : i32, i32
  }
  func.func @transform_1(%arg0: i32) -> (i32, i32) {
    %c0_i32 = arith.constant 0 : i32
    %c0_i32_0 = arith.constant 0 : i32
    return %arg0, %c0_i32 : i32, i32
  }
  func.func @transform_2(%arg0: i32) -> (i32, i32) {
    %c0_i32 = arith.constant 0 : i32
    %c0_i32_0 = arith.constant 0 : i32
    return %c0_i32, %arg0 : i32, i32
  }
}

</mosaic_0001>

<llo_original>
// kernel: _forward.1
$region0: #{_forward.1}
  #allocation0 [shape = 'u32[]', space=smem, size = 0x4, offset = 0x4, fixed_abs, tag = 'smem constant byte address 0x4 - core index']
  #allocation1 [shape = 'u32[144,128]{1,0:T(1,128)}', space=vmem, size = 0x12000, scoped, tag = 'internal scratch']
  %s0 = inlined_call_operand.vmem [shape: f32[8,128], index: 0, kind: input, shape index: {}]
  %s1 = inlined_call_operand.hbm [shape: f32[200,128], index: 1, kind: input, shape index: {}]
  %s2 = inlined_call_operand.vmem [shape: f32[1,200], index: 2, kind: output, shape index: {}]
  %s3 = sld [smem:[#allocation0]]
  $region45: #{_forward.1} parent=0
    _
  %s5 = ssub.s32 1, %s3
  %s6 = scalar_select 0, %s5, %s3
  $region1: #{_forward.1} parent=0
    #allocation2 [shape = 'u8[131072]{0}', space=vmem, size = 0x20000, scoped, tag = 'input window, operand 1']
    #allocation3 [shape = 's32[2]{0}', space=sflag, size = 0x8, scoped, tag = 'scoped memory for _forward.1']
    %7 = vsyncpa [#allocation3], 0
    %s8 = scalar_lea.sflag [#allocation3], 1
    %9 = vsyncpa %s8, 0
    loop: start=0, step=1, limit=4
    $region2: #{_forward.1} parent=1 // loop_pre_header
      _
    $region3: #{_forward.1} parent=1 // loop_header
      %s11 = sphi 0, %s15
      %p12 = scmp.ge.s32.totalorder %s11, 4
      %s19 = sphi 0, %s19
      %s21 = sphi 0, %s19
      %s22 = sphi 0, %s21
      %s36 = sphi 0, %s22
      %s42 = sphi 0, %s44
      %s45 = sphi 0, %s42
      %s46 = sphi 0, %s45
      %s62 = sphi 0, %s46
      %s68 = sphi 0, %s70
      %s71 = sphi 0, %s68
      %s72 = sphi 0, %s71
      %s88 = sphi 0, %s72
    $region4: #{_forward.1} parent=1 // loop_header_branch
      %14 = sbr.rel (%p12) target = $region8
    $region5: #{_forward.1} parent=1 // loop_body
      %s16 = ssub.s32 %s11, 1
      %s17 = ssub.s32 %s11, 2
      %s18 = sadd.s32 %s11, 1
      %s20 = sadd.s32 %s19, 1
      %p23 = scmp.eq.s32.totalorder %s11, 1
      %p24 = scmp.ne.s32.totalorder %s19, %s21
      %p25 = scmp.eq.s32.totalorder %s11, 0
      %p26 = por %p24, %p25
      %p27 = scmp.ne.s32.totalorder %s19, %s21
      %p28 = scmp.eq.s32.totalorder %s16, 1
      %p29 = por %p27, %p28
      %p30 = scmp.ne.s32.totalorder %s21, %s22
      %p31 = scmp.eq.s32.totalorder %s16, 0
      %p32 = por %p30, %p31
      %p33 = scmp.ne.s32.totalorder %s21, %s22
      %p34 = scmp.eq.s32.totalorder %s17, 1
      %p35 = por %p33, %p34
      %p37 = scmp.ne.s32.totalorder %s22, %s36
      %p38 = scmp.eq.s32.totalorder %s17, 0
      %p39 = por %p37, %p38
      %s40 = ssub.s32 %s11, %s18
      %p41 = scmp.eq.s32.totalorder %s40, 0
      %s43 = sadd.s32 %s42, 1
      %s44 = scalar_select %p41, %s42, %s43
      %p47 = pneg %p41
      %p48 = scmp.eq.s32.totalorder %s11, 1
      %p49 = por %p47, %p48
      %p50 = scmp.ne.s32.totalorder %s42, %s45
      %p51 = scmp.eq.s32.totalorder %s11, 0
      %p52 = por %p50, %p51
      %p53 = scmp.ne.s32.totalorder %s42, %s45
      %p54 = scmp.eq.s32.totalorder %s16, 1
      %p55 = por %p53, %p54
      %p56 = scmp.ne.s32.totalorder %s45, %s46
      %p57 = scmp.eq.s32.totalorder %s16, 0
      %p58 = por %p56, %p57
      %p59 = scmp.ne.s32.totalorder %s45, %s46
      %p60 = scmp.eq.s32.totalorder %s17, 1
      %p61 = por %p59, %p60
      %p63 = scmp.ne.s32.totalorder %s46, %s62
      %p64 = scmp.eq.s32.totalorder %s17, 0
      %p65 = por %p63, %p64
      %s66 = ssub.s32 %s11, %s18
      %p67 = scmp.eq.s32.totalorder %s66, 0
      %s69 = sadd.s32 %s68, 1
      %s70 = scalar_select %p67, %s68, %s69
      %p73 = pneg %p67
      %p74 = scmp.eq.s32.totalorder %s11, 1
      %p75 = por %p73, %p74
      %p76 = scmp.ne.s32.totalorder %s68, %s71
      %p77 = scmp.eq.s32.totalorder %s11, 0
      %p78 = por %p76, %p77
      %p79 = scmp.ne.s32.totalorder %s68, %s71
      %p80 = scmp.eq.s32.totalorder %s16, 1
      %p81 = por %p79, %p80
      %p82 = scmp.ne.s32.totalorder %s71, %s72
      %p83 = scmp.eq.s32.totalorder %s16, 0
      %p84 = por %p82, %p83
      %p85 = scmp.ne.s32.totalorder %s71, %s72
      %p86 = scmp.eq.s32.totalorder %s17, 1
      %p87 = por %p85, %p86
      %p89 = scmp.ne.s32.totalorder %s72, %s88
      %p90 = scmp.eq.s32.totalorder %s17, 0
      %p91 = por %p89, %p90
      %p92 = scmp.le.s32.totalorder 1, %s11
      %p93 = scmp.lt.s32.totalorder %s11, 3
      %p94 = pnand %p92, %p93
      %p95 = pneg %p94
      // Predicated region
      $region9: #{_forward.1} parent=5 // pred_check
        _
      $region10: #{_forward.1} parent=5 // pred_check_branch
        %97 = sbr.rel (%p94) target = $region12
      $region11: #{_forward.1} parent=5 // pred_region
        %s98 = ssub.s32 %s11, 1
        // Predicated region
        $region13: #{_forward.1} parent=11 // pred_check
          %p99 = pneg %p32
        $region14: #{_forward.1} parent=11 // pred_check_branch
          %101 = sbr.rel (%p99) target = $region16
        $region15: #{_forward.1} parent=11 // pred_region
          _
        $region16: #{_forward.1} parent=11 // pred_fallthru
          _
      $region12: #{_forward.1} parent=5 // pred_fallthru
        _
      %p102 = scmp.lt.s32.totalorder %s11, 2
      // Predicated region
      $region17: #{_forward.1} parent=5 // pred_check
        %p103 = pneg %p102
      $region18: #{_forward.1} parent=5 // pred_check_branch
        %105 = sbr.rel (%p103) target = $region20
      $region19: #{_forward.1} parent=5 // pred_region
        // Predicated region
        $region21: #{_forward.1} parent=19 // pred_check
          %p106 = pneg %p52
        $region22: #{_forward.1} parent=19 // pred_check_branch
          %108 = sbr.rel (%p106) target = $region24
        $region23: #{_forward.1} parent=19 // pred_region
          %s109 = sand.u32 %s42, 1
          %s110 = scalar_lea.sflag [#allocation3], %s109
          %s111 = sand.u32 %s42, 1
          %s112 = smul.addr %s111, 128
          %s113 = scalar_lea.vmem [#allocation2], %s112
          %s114 = smul.u32 16, %s11
          %s115 = ssub.s32 25, %s114
          %p116 = scmp.lt.s32.totalorder %s115, 16
          %s117 = scalar_select %p116, %s115, 16
          %s118 = smul.u32 128, %s117
          %s120 = ssub.s32 2048, %s118
          %121 = vsyncadd %s110, %s120
          %p122 = scmp.ne.s32.totalorder 0, %s118
          %s123 = smul.addr %s114, 128
          %s124 = scalar_lea.hbm %s1, %s123
          %s125 = smul.u32 8, %s117
          %s126 = sshll.u32 %s113, 4
          %s127 = int_to_ptr.vmem [resolvable:$true] %s126
          %s128 = sshll.u32 %s125, 4
          %132 = dma.hbm_to_vmem [thread:$0]  (%p122), %s124, %s128, %s127, %s110, 128, 128, 8
        $region24: #{_forward.1} parent=19 // pred_fallthru
          _
      $region20: #{_forward.1} parent=5 // pred_fallthru
        _
      %p133 = scmp.le.s32.totalorder 1, %s11
      %p134 = scmp.lt.s32.totalorder %s11, 3
      %p135 = pnand %p133, %p134
      %p136 = pneg %p135
      // Predicated region
      $region25: #{_forward.1} parent=5 // pred_check
        _
      $region26: #{_forward.1} parent=5 // pred_check_branch
        %138 = sbr.rel (%p135) target = $region28
      $region27: #{_forward.1} parent=5 // pred_region
        %s139 = ssub.s32 %s11, 1
        %s140 = sand.u32 %s45, 1
        %s141 = scalar_lea.sflag [#allocation3], %s140
        %s142 = sand.u32 %s45, 1
        %s143 = smul.addr %s142, 128
        %s144 = scalar_lea.vmem [#allocation2], %s143
        // Predicated region
        $region29: #{_forward.1} parent=27 // pred_check
          %p145 = pneg %p58
        $region30: #{_forward.1} parent=27 // pred_check_branch
          %147 = sbr.rel (%p145) target = $region32
        $region31: #{_forward.1} parent=27 // pred_region
          %148 = dma.done %s141, 2048
        $region32: #{_forward.1} parent=27 // pred_fallthru
          _
        %p149 = pneg %p32
        %p150 = pneg %p29
        %s151 = sand.u32 %s45, 1
        %s152 = scalar_lea.sflag [#allocation3], %s151
        %s153 = sand.u32 %s45, 1
        %s154 = smul.addr %s153, 128
        %s155 = scalar_lea.vmem [#allocation2], %s154
        %p156 = pneg %p58
        %p157 = pneg %p55
        %p158 = pneg %p84
        %p159 = pneg %p81
        %p160 = scmp.lt.s32.totalorder %s16, 1
        %s161 = scalar_select %p160, %s16, 1
        %s162 = scalar_lea.vmem %s2, %s161
        %s163 = smul.u32 16, %s16
        %s164 = ssub.s32 25, %s163
        %p165 = scmp.lt.s32.totalorder %s164, 16
        %s166 = scalar_select %p165, %s164, 16
        %s167 = smul.u32 128, %s166
        %p168 = scmp.lt.s32.totalorder %s16, 1
        %s169 = scalar_select %p168, %s16, 1
        %s170 = scalar_lea.vmem %s2, %s169
        %v171 = vld [vmem:[%s144] sm:$0xff]
        %v172 = vld [vmem:[%s144 + $0x8] sm:$0xff]
        %v173 = vld [vmem:[%s144 + $0x10] sm:$0xff]
        %v174 = vld [vmem:[%s144 + $0x18] sm:$0xff]
        %v175 = vld [vmem:[%s144 + $0x20] sm:$0xff]
        %v176 = vld [vmem:[%s144 + $0x28] sm:$0xff]
        %v177 = vld [vmem:[%s144 + $0x30] sm:$0xff]
        %v178 = vld [vmem:[%s144 + $0x38] sm:$0xff]
        %v179 = vld [vmem:[%s144 + $0x40] sm:$0xff]
        %v180 = vld [vmem:[%s144 + $0x48] sm:$0xff]
        %v181 = vld [vmem:[%s144 + $0x50] sm:$0xff]
        %v182 = vld [vmem:[%s144 + $0x58] sm:$0xff]
        %v183 = vld [vmem:[%s144 + $0x60] sm:$0xff]
        %v184 = vld [vmem:[%s144 + $0x68] sm:$0xff]
        %v185 = vld [vmem:[%s144 + $0x70] sm:$0xff]
        %v186 = vld [vmem:[%s144 + $0x78] sm:$0xff]
        %v187 = vld [vmem:[%s0] sm:$0xff]
        %188 = vmatprep.subr.mxu0 0.0
        %189 = vmatpush1.xpose.msra.mxu0 %v171
        %190 = vmatprep.subr.mxu0 0.0
        %191 = vmatpush1.xpose.msra.mxu0 %v172
        %192 = vmatprep.subr.mxu0 0.0
        %193 = vmatpush1.xpose.msra.mxu0 %v173
        %194 = vmatprep.subr.mxu0 0.0
        %195 = vmatpush1.xpose.msra.mxu0 %v174
        %196 = vmatprep.subr.mxu0 0.0
        %197 = vmatpush1.xpose.msra.mxu0 %v175
        %198 = vmatprep.subr.mxu0 0.0
        %199 = vmatpush1.xpose.msra.mxu0 %v176
        %200 = vmatprep.subr.mxu0 0.0
        %201 = vmatpush1.xpose.msra.mxu0 %v177
        %202 = vmatprep.subr.mxu0 0.0
        %203 = vmatpush1.xpose.msra.mxu0 %v178
        %204 = vmatprep.subr.mxu0 0.0
        %205 = vmatpush1.xpose.msra.mxu0 %v179
        %206 = vmatprep.subr.mxu0 0.0
        %207 = vmatpush1.xpose.msra.mxu0 %v180
        %208 = vmatprep.subr.mxu0 0.0
        %209 = vmatpush1.xpose.msra.mxu0 %v181
        %210 = vmatprep.subr.mxu0 0.0
        %211 = vmatpush1.xpose.msra.mxu0 %v182
        %212 = vmatprep.subr.mxu0 0.0
        %213 = vmatpush1.xpose.msra.mxu0 %v183
        %214 = vmatprep.subr.mxu0 0.0
        %215 = vmatpush1.xpose.msra.mxu0 %v184
        %216 = vmatprep.subr.mxu0 0.0
        %217 = vmatpush1.xpose.msra.mxu0 %v185
        %218 = vmatprep.subr.mxu0 0.0
        %219 = vmatpush1.xpose.msra.mxu0 %v186
        %220 = vmatprep.subr.mxu0 0.0
        %221 = vmatpush1.xpose.msra.mxu0 0.0
        %222 = vmatprep.subr.mxu0 0.0
        %223 = vmatpush1.xpose.msra.mxu0 0.0
        %224 = vmatprep.subr.mxu0 0.0
        %225 = vmatpush1.xpose.msra.mxu0 0.0
        %226 = vmatprep.subr.mxu0 0.0
        %227 = vmatpush1.xpose.msra.mxu0 0.0
        %228 = vmatprep.subr.mxu0 0.0
        %229 = vmatpush1.xpose.msra.mxu0 0.0
        %230 = vmatprep.subr.mxu0 0.0
        %231 = vmatpush1.xpose.msra.mxu0 0.0
        %232 = vmatprep.subr.mxu0 0.0
        %233 = vmatpush1.xpose.msra.mxu0 0.0
        %234 = vmatprep.subr.mxu0 0.0
        %235 = vmatpush1.xpose.msra.mxu0 0.0
        %236 = vmatprep.subr.mxu0 0.0
        %237 = vmatpush1.xpose.msra.mxu0 0.0
        %238 = vmatprep.subr.mxu0 0.0
        %239 = vmatpush1.xpose.msra.mxu0 0.0
        %240 = vmatprep.subr.mxu0 0.0
        %241 = vmatpush1.xpose.msra.mxu0 0.0
        %242 = vmatprep.subr.mxu0 0.0
        %243 = vmatpush1.xpose.msra.mxu0 0.0
        %244 = vmatprep.subr.mxu0 0.0
        %245 = vmatpush1.xpose.msra.mxu0 0.0
        %246 = vmatprep.subr.mxu0 0.0
        %247 = vmatpush1.xpose.msra.mxu0 0.0
        %248 = vmatprep.subr.mxu0 0.0
        %249 = vmatpush1.xpose.msra.mxu0 0.0
        %250 = vmatprep.subr.mxu0 0.0
        %251 = vmatpush1.xpose.msra.mxu0 0.0
        %252 = vmatprep.mubr.f32.mxu0 0.0
        %253 = vmatmul.mubr.f32.gmra.mrb[0].mxu0 %v187
        %v254 = vpop.f32.mrb[0].mxu0
        %v255 = vadd.f32 0.0, %v254
        %v256 = vpop.f32.mrb[0].mxu0
        %257 = vdwg.mxu0
        %v258 = vmul.f32 %v171, %v171
        %v259 = vmul.f32 %v172, %v172
        %v260 = vmul.f32 %v173, %v173
        %v261 = vmul.f32 %v174, %v174
        %v262 = vmul.f32 %v175, %v175
        %v263 = vmul.f32 %v176, %v176
        %v264 = vmul.f32 %v177, %v177
        %v265 = vmul.f32 %v178, %v178
        %v266 = vmul.f32 %v179, %v179
        %v267 = vmul.f32 %v180, %v180
        %v268 = vmul.f32 %v181, %v181
        %v269 = vmul.f32 %v182, %v182
        %v270 = vmul.f32 %v183, %v183
        %v271 = vmul.f32 %v184, %v184
        %v272 = vmul.f32 %v185, %v185
        %v273 = vmul.f32 %v186, %v186
        %274 = vmatprep.subr.mxu0 0.0
        %275 = vmatpush1.xpose.msra.mxu0 %v258
        %276 = vmatprep.subr.mxu0 0.0
        %277 = vmatpush1.xpose.msra.mxu0 %v259
        %278 = vmatprep.subr.mxu0 0.0
        %279 = vmatpush1.xpose.msra.mxu0 %v260
        %280 = vmatprep.subr.mxu0 0.0
        %281 = vmatpush1.xpose.msra.mxu0 %v261
        %282 = vmatprep.subr.mxu0 0.0
        %283 = vmatpush1.xpose.msra.mxu0 %v262
        %284 = vmatprep.subr.mxu0 0.0
        %285 = vmatpush1.xpose.msra.mxu0 %v263
        %286 = vmatprep.subr.mxu0 0.0
        %287 = vmatpush1.xpose.msra.mxu0 %v264
        %288 = vmatprep.subr.mxu0 0.0
        %289 = vmatpush1.xpose.msra.mxu0 %v265
        %290 = vmatprep.subr.mxu0 0.0
        %291 = vmatpush1.xpose.msra.mxu0 %v266
        %292 = vmatprep.subr.mxu0 0.0
        %293 = vmatpush1.xpose.msra.mxu0 %v267
        %294 = vmatprep.subr.mxu0 0.0
        %295 = vmatpush1.xpose.msra.mxu0 %v268
        %296 = vmatprep.subr.mxu0 0.0
        %297 = vmatpush1.xpose.msra.mxu0 %v269
        %298 = vmatprep.subr.mxu0 0.0
        %299 = vmatpush1.xpose.msra.mxu0 %v270
        %300 = vmatprep.subr.mxu0 0.0
        %301 = vmatpush1.xpose.msra.mxu0 %v271
        %302 = vmatprep.subr.mxu0 0.0
        %303 = vmatpush1.xpose.msra.mxu0 %v272
        %304 = vmatprep.subr.mxu0 0.0
        %305 = vmatpush1.xpose.msra.mxu0 %v273
        %306 = vmatprep.subr.mxu0 0.0
        %307 = vmatpush1.xpose.msra.mxu0 0.0
        %308 = vmatprep.subr.mxu0 0.0
        %309 = vmatpush1.xpose.msra.mxu0 0.0
        %310 = vmatprep.subr.mxu0 0.0
        %311 = vmatpush1.xpose.msra.mxu0 0.0
        %312 = vmatprep.subr.mxu0 0.0
        %313 = vmatpush1.xpose.msra.mxu0 0.0
        %314 = vmatprep.subr.mxu0 0.0
        %315 = vmatpush1.xpose.msra.mxu0 0.0
        %316 = vmatprep.subr.mxu0 0.0
        %317 = vmatpush1.xpose.msra.mxu0 0.0
        %318 = vmatprep.subr.mxu0 0.0
        %319 = vmatpush1.xpose.msra.mxu0 0.0
        %320 = vmatprep.subr.mxu0 0.0
        %321 = vmatpush1.xpose.msra.mxu0 0.0
        %322 = vmatprep.subr.mxu0 0.0
        %323 = vmatpush1.xpose.msra.mxu0 0.0
        %324 = vmatprep.subr.mxu0 0.0
        %325 = vmatpush1.xpose.msra.mxu0 0.0
        %326 = vmatprep.subr.mxu0 0.0
        %327 = vmatpush1.xpose.msra.mxu0 0.0
        %328 = vmatprep.subr.mxu0 0.0
        %329 = vmatpush1.xpose.msra.mxu0 0.0
        %330 = vmatprep.subr.mxu0 0.0
        %331 = vmatpush1.xpose.msra.mxu0 0.0
        %332 = vmatprep.subr.mxu0 0.0
        %333 = vmatpush1.xpose.msra.mxu0 0.0
        %334 = vmatprep.subr.mxu0 0.0
        %335 = vmatpush1.xpose.msra.mxu0 0.0
        %336 = vmatprep.subr.mxu0 0.0
        %337 = vmatpush1.xpose.msra.mxu0 0.0
        %338 = vmatprep.mubr.f32.mxu0 0.0
        %339 = vmatmul.mubr.f32.gmra.mrb[0].mxu0 1.0
        %v340 = vpop.f32.mrb[0].mxu0
        %v341 = vadd.f32 0.0, %v340
        %v342 = vpop.f32.mrb[0].mxu0
        %343 = vdwg.mxu0
        %v344 = vmax.f32 %v341, 1e-24
        %v345 = vrsqrt.pop %v344
        %v346 = vmul.f32 %v255, %v345
        %v347 = vmax.f32 %v346, 0.0
        %v348 = vmin.f32 %v347, 1.0
        %v349 = vmul.f32 %v348, 1.442695
        %v350 = vpow.pop %v349
        %351 = vst [vmem:[%s170] sm:$0x1] %v350
        %p352 = scmp.lt.s32.totalorder %s16, 1
        %s353 = scalar_select %p352, %s16, 1
        %s354 = scalar_lea.vmem %s2, %s353
        // Predicated region
        $region33: #{_forward.1} parent=27 // pred_check
          %p355 = pneg %p81
        $region34: #{_forward.1} parent=27 // pred_check_branch
          %357 = sbr.rel (%p355) target = $region36
        $region35: #{_forward.1} parent=27 // pred_region
          _
        $region36: #{_forward.1} parent=27 // pred_fallthru
          _
      $region28: #{_forward.1} parent=5 // pred_fallthru
        _
      %p358 = scmp.le.s32.totalorder 2, %s11
      // Predicated region
      $region37: #{_forward.1} parent=5 // pred_check
        %p359 = pneg %p358
      $region38: #{_forward.1} parent=5 // pred_check_branch
        %361 = sbr.rel (%p359) target = $region40
      $region39: #{_forward.1} parent=5 // pred_region
        %s362 = ssub.s32 %s11, 2
        // Predicated region
        $region41: #{_forward.1} parent=39 // pred_check
          %p363 = pneg %p87
        $region42: #{_forward.1} parent=39 // pred_check_branch
          %365 = sbr.rel (%p363) target = $region44
        $region43: #{_forward.1} parent=39 // pred_region
          %p366 = scmp.lt.s32.totalorder %s17, 1
          %s367 = scalar_select %p366, %s17, 1
          %s368 = scalar_lea.vmem %s2, %s367
        $region44: #{_forward.1} parent=39 // pred_fallthru
          _
      $region40: #{_forward.1} parent=5 // pred_fallthru
        _
    $region6: #{_forward.1} parent=1 // loop_footer
      %s15 = sadd.s32 1, %s11
    $region7: #{_forward.1} parent=1 // loop_footer_branch
      %10 = sbr.rel target = $region3
    $region8: #{_forward.1} parent=1 // loop_exit
      _
    %369 = vsyncpa [#allocation3], 1
    %s370 = scalar_lea.sflag [#allocation3], 1
    %371 = vsyncpa %s370, 1

</llo_original>
